<compile_context>
chip_gen: v7x
topology: tpu7x:2x2x1
jax: 0.10.0
libtpu: 0.0.40
codegen_flags: <defaults>
</compile_context>

<pallas_src>
import jax
import jax.numpy as jnp
from jax import lax
from jax.experimental import pallas as pl
from jax.experimental.pallas import tpu as pltpu


def _leaky_relu(x, slope=0.2):
    return jnp.where(x > 0, x, slope * x)


def zdisc_kernel(x_ref, w1_ref, b1_ref, w2r_ref, b2_ref, w3_ref, b3_ref, out_ref):
    # linear1 + leaky_relu: (B, Z)bf16 @ (Z, d)bf16 -> (B, d) f32
    x_bf = x_ref[...].astype(jnp.bfloat16)          # cast in-kernel (no wrapper op)
    h1 = jnp.dot(x_bf, w1_ref[...], preferred_element_type=jnp.float32)
    h1 = _leaky_relu(h1 + b1_ref[...])

    # linear2 over the merged batch. PyTorch computes h1.view(1, B*d) @ W2.T.
    # Row-major, that equals sum_b h1[b, :] @ W2T[b*d:(b+1)*d, :], so W2T is
    # passed pre-reshaped to (B, d, d) and we do one batched MXU contraction
    # followed by a VPU sum over the batch axis (no (8,128)->(1,1024) relayout,
    # no 8 separate M=1 matmul pushes).
    h1b = h1.astype(jnp.bfloat16)                   # single (B, d) pack, hoisted
    h2pre = lax.dot_general(
        h1b[:, None, :], w2r_ref[...],
        dimension_numbers=(((2,), (1,)), ((0,), (0,))),
        preferred_element_type=jnp.float32)          # (B, 1, d)
    h2 = _leaky_relu(jnp.sum(h2pre, axis=0) + b2_ref[...])   # (1, d), f32 epilogue

    # linear3 (d -> 1) as VPU multiply + cross-lane reduce instead of an
    # N=1 MXU matmul with a 128x-padded (128,1) weight tile.
    h3 = jnp.sum(h2 * w3_ref[...], axis=-1, keepdims=True) + b3_ref[...]
    out_ref[...] = jax.nn.sigmoid(h3)                # (1, 1)


def zdiscriminator_mergebatch(x, params):
    """Fused forward pass.

    x: (batchSize, z_size) float32 (cast to bf16 inside the kernel).
    params:
      w1t  (z_size, d)   bf16   linear1.weight.T
      b1   (1, d)        f32
      w2r  (B, d, d)     bf16   linear2.weight.T reshaped (B*d, d) -> (B, d, d)
      b2   (1, d)        f32
      w3   (1, d)        f32    linear3.weight as a row vector
      b3   (1, 1)        f32
    """
    w1t, b1, w2r, b2, w3, b3 = (
        params["w1t"], params["b1"], params["w2r"],
        params["b2"], params["w3"], params["b3"],
    )
    B, Z = x.shape
    d = w1t.shape[1]
    assert w2r.shape == (B, d, d), "w2r must be linear2.weight.T reshaped to (B, d, d)"

    flops = 2 * (B * Z * d + B * d * d + d)
    bytes_accessed = (
        x.size * x.dtype.itemsize
        + w1t.size * 2 + w2r.size * 2
        + (b1.size + b2.size + w3.size + b3.size) * 4
        + 4  # output
    )
    vmem = pl.BlockSpec(memory_space=pltpu.MemorySpace.VMEM)
    return pl.pallas_call(
        zdisc_kernel,
        out_shape=jax.ShapeDtypeStruct((1, 1), jnp.float32),
        grid=(),
        in_specs=[vmem] * 7,
        out_specs=vmem,
        cost_estimate=pl.CostEstimate(
            flops=flops, transcendentals=d, bytes_accessed=bytes_accessed),
    )(x, w1t, b1, w2r, b2, w3, b3)


def init_params(key, z_size, batch_size, d=128, std=0.02):
    """Mirrors normal_init(mean=0, std=0.02) with zero biases.

    Weights stored transposed / reshaped for the kernel; big ones in bf16."""
    k1, k2, k3 = jax.random.split(key, 3)
    return {
        "w1t": (jax.random.normal(k1, (z_size, d), jnp.float32) * std).astype(jnp.bfloat16),
        "b1": jnp.zeros((1, d), jnp.float32),
        "w2r": (jax.random.normal(k2, (batch_size, d, d), jnp.float32) * std).astype(jnp.bfloat16),
        "b2": jnp.zeros((1, d), jnp.float32),
        "w3": jax.random.normal(k3, (1, d), jnp.float32) * std,
        "b3": jnp.zeros((1, 1), jnp.float32),
    }


def _reference(x, p):
    """Pure-JAX reference using the same (bf16-rounded) parameters, f32 math."""
    hp = jax.lax.Precision.HIGHEST
    xf = x.astype(jnp.bfloat16).astype(jnp.float32)
    w1 = p["w1t"].astype(jnp.float32)
    z1 = jnp.dot(xf, w1, precision=hp) + p["b1"]
    h1 = jnp.where(z1 > 0, z1, 0.2 * z1)
    # kernel casts h1 to bf16 before linear2; mirror that
    h1 = h1.astype(jnp.bfloat16).astype(jnp.float32).reshape(1, -1)      # (1, B*d)
    B, d, _ = p["w2r"].shape
    w2 = p["w2r"].astype(jnp.float32).reshape(B * d, d)
    z2 = jnp.dot(h1, w2, precision=hp) + p["b2"]
    h2 = jnp.where(z2 > 0, z2, 0.2 * z2)
    z3 = jnp.dot(h2, p["w3"].T, precision=hp) + p["b3"]
    return jax.nn.sigmoid(z3)


if __name__ == "__main__":
    z_size = 32
    batch_size = 8
    d = 128

    key = jax.random.PRNGKey(0)
    kx, kp = jax.random.split(key)
    x = jax.random.normal(kx, (batch_size, z_size), jnp.float32)
    params = init_params(kp, z_size, batch_size, d)

    y = zdiscriminator_mergebatch(x, params)
    y = jax.block_until_ready(y)

    y_ref = _reference(x, params)
    assert y.shape == (1, 1), y.shape
    # rtol-dominant check; post-sigmoid values sit near 0.5 so a too-tight
    # atol would flake on MXU vs HIGHEST accumulation-order differences.
    assert jnp.allclose(y, y_ref, atol=5e-4, rtol=1e-3), (y, y_ref)

    print("KERNEL_OK")
</pallas_src>

<mosaic_0001>
module attributes {stable_mosaic.version = 11 : i64} {
  func.func @zdisc_kernel(%arg0: memref<8x32xf32, #tpu.memory_space<vmem>>, %arg1: memref<32x128xbf16, #tpu.memory_space<vmem>>, %arg2: memref<1x128xf32, #tpu.memory_space<vmem>>, %arg3: memref<8x128x128xbf16, #tpu.memory_space<vmem>>, %arg4: memref<1x128xf32, #tpu.memory_space<vmem>>, %arg5: memref<1x128xf32, #tpu.memory_space<vmem>>, %arg6: memref<1x1xf32, #tpu.memory_space<vmem>>, %arg7: memref<1x1xf32, #tpu.memory_space<vmem>>) attributes {dimension_semantics = [], scalar_prefetch = 0 : i64, scratch_operands = 0 : i64, tpu.core_type = #tpu.core_type<tc>} {
    %c0 = arith.constant 0 : index
    %c0_0 = arith.constant 0 : index
    %0 = vector.load %arg0[%c0, %c0_0] : memref<8x32xf32, #tpu.memory_space<vmem>>, vector<8x32xf32>
    %1 = arith.truncf %0 : vector<8x32xf32> to vector<8x32xbf16>
    %c0_1 = arith.constant 0 : index
    %c0_2 = arith.constant 0 : index
    %2 = vector.load %arg1[%c0_1, %c0_2] : memref<32x128xbf16, #tpu.memory_space<vmem>>, vector<32x128xbf16>
    %cst = arith.constant dense<0.000000e+00> : vector<8x128xf32>
    %3 = tpu.matmul %1, %2, %cst {dimension_numbers = #tpu.dot_dimension_numbers<[1], [0], [0], [1], [0, 0, 1, 1], [], []>} : vector<8x32xbf16>, vector<32x128xbf16>, vector<8x128xf32> -> vector<8x128xf32>
    %c0_3 = arith.constant 0 : index
    %c0_4 = arith.constant 0 : index
    %4 = vector.load %arg2[%c0_3, %c0_4] : memref<1x128xf32, #tpu.memory_space<vmem>>, vector<1x128xf32>
    %5 = vector.broadcast %4 : vector<1x128xf32> to vector<8x128xf32>
    %6 = arith.addf %3, %5 : vector<8x128xf32>
    %cst_5 = arith.constant 0.000000e+00 : f32
    %7 = vector.broadcast %cst_5 : f32 to vector<8x128xf32>
    %8 = arith.cmpf ogt, %6, %7 : vector<8x128xf32>
    %cst_6 = arith.constant 2.000000e-01 : f32
    %9 = vector.broadcast %cst_6 : f32 to vector<8x128xf32>
    %10 = arith.mulf %9, %6 : vector<8x128xf32>
    %11 = arith.select %8, %6, %10 : vector<8x128xi1>, vector<8x128xf32>
    %12 = arith.truncf %11 : vector<8x128xf32> to vector<8x128xbf16>
    %13 = vector.shape_cast %12 : vector<8x128xbf16> to vector<8x1x128xbf16>
    %c0_7 = arith.constant 0 : index
    %c0_8 = arith.constant 0 : index
    %c0_9 = arith.constant 0 : index
    %14 = vector.load %arg3[%c0_7, %c0_8, %c0_9] : memref<8x128x128xbf16, #tpu.memory_space<vmem>>, vector<8x128x128xbf16>
    %cst_10 = arith.constant dense<0.000000e+00> : vector<8x1x128xf32>
    %15 = tpu.matmul %13, %14, %cst_10 {dimension_numbers = #tpu.dot_dimension_numbers<[2], [1], [1], [2], [0, 0, 0, 1, 1, 2], [0], [0]>} : vector<8x1x128xbf16>, vector<8x128x128xbf16>, vector<8x1x128xf32> -> vector<8x1x128xf32>
    %cst_11 = arith.constant dense<0.000000e+00> : vector<1x128xf32>
    %16 = vector.multi_reduction <add>, %15, %cst_11 [0] : vector<8x1x128xf32> to vector<1x128xf32>
    %c0_12 = arith.constant 0 : index
    %c0_13 = arith.constant 0 : index
    %17 = vector.load %arg4[%c0_12, %c0_13] : memref<1x128xf32, #tpu.memory_space<vmem>>, vector<1x128xf32>
    %18 = arith.addf %16, %17 : vector<1x128xf32>
    %cst_14 = arith.constant 0.000000e+00 : f32
    %19 = vector.broadcast %cst_14 : f32 to vector<1x128xf32>
    %20 = arith.cmpf ogt, %18, %19 : vector<1x128xf32>
    %cst_15 = arith.constant 2.000000e-01 : f32
    %21 = vector.broadcast %cst_15 : f32 to vector<1x128xf32>
    %22 = arith.mulf %21, %18 : vector<1x128xf32>
    %23 = arith.select %20, %18, %22 : vector<1x128xi1>, vector<1x128xf32>
    %c0_16 = arith.constant 0 : index
    %c0_17 = arith.constant 0 : index
    %24 = vector.load %arg5[%c0_16, %c0_17] : memref<1x128xf32, #tpu.memory_space<vmem>>, vector<1x128xf32>
    %25 = arith.mulf %23, %24 : vector<1x128xf32>
    %cst_18 = arith.constant dense<0.000000e+00> : vector<1xf32>
    %26 = vector.multi_reduction <add>, %25, %cst_18 [1] : vector<1x128xf32> to vector<1xf32>
    %27 = vector.shape_cast %26 : vector<1xf32> to vector<1x1xf32>
    %c0_19 = arith.constant 0 : index
    %c0_20 = arith.constant 0 : index
    %28 = vector.load %arg6[%c0_19, %c0_20] : memref<1x1xf32, #tpu.memory_space<vmem>>, vector<1x1xf32>
    %29 = arith.addf %27, %28 : vector<1x1xf32>
    %30 = arith.negf %29 : vector<1x1xf32>
    %31 = math.exp %30 : vector<1x1xf32>
    %cst_21 = arith.constant 1.000000e+00 : f32
    %32 = vector.broadcast %cst_21 : f32 to vector<1x1xf32>
    %33 = arith.addf %32, %31 : vector<1x1xf32>
    %34 = arith.divf %32, %33 : vector<1x1xf32>
    %c0_22 = arith.constant 0 : index
    %c0_23 = arith.constant 0 : index
    %35 = vector.load %arg7[%c0_22, %c0_23] : memref<1x1xf32, #tpu.memory_space<vmem>>, vector<1x1xf32>
    tpu.vector_store %arg7[%c0_22, %c0_23], %34 {strides = array<i32>} : memref<1x1xf32, #tpu.memory_space<vmem>>, vector<1x1xf32>,
    return
  }
}

</mosaic_0001>

<llo_original>
// kernel: tpu_custom_call.1
$region0: #{tpu_custom_call.1}
  #allocation0 [shape = 'u32[]', space=smem, size = 0x4, offset = 0x4, fixed_abs, tag = 'smem constant byte address 0x4 - core index']
  #allocation1 [shape = 'u32[144,128]{1,0:T(1,128)}', space=vmem, size = 0x12000, scoped, tag = 'internal scratch']
  #allocation2 [shape = 'f32[1,1]{1,0:T(1,128)S(1)}', space=vmem, size = 0x200, scoped, tag = 'scoped memory for tpu_custom_call.1']
  %s0 = inlined_call_operand.hbm [shape: f32[8,32], index: 0, kind: input, shape index: {}]
  %s1 = inlined_call_operand.hbm [shape: bf16[32,128], index: 1, kind: input, shape index: {}]
  %s2 = inlined_call_operand.vmem [shape: f32[1,128], index: 2, kind: input, shape index: {}]
  %s3 = inlined_call_operand.hbm [shape: bf16[8,128,128], index: 3, kind: input, shape index: {}]
  %s4 = inlined_call_operand.vmem [shape: f32[1,128], index: 4, kind: input, shape index: {}]
  %s5 = inlined_call_operand.vmem [shape: f32[1,128], index: 5, kind: input, shape index: {}]
  %s6 = inlined_call_operand.<no memory space> [shape: f32[1,1], index: 6, kind: input, shape index: {}]
  %s7 = inlined_call_operand.hbm [shape: f32[1,1], index: 7, kind: output, shape index: {}]
  %s8 = sld [smem:[#allocation0]]
  $region50: #{tpu_custom_call.1} parent=0
    _
  %s10 = ssub.s32 1, %s8
  %s11 = scalar_select 0, %s10, %s8
  %v12 = vstv %s6
  %13 = vst [vmem:[#allocation2] sm:$0x1] %v12
  $region1: #{tpu_custom_call.1} parent=0
    #allocation3 [shape = 'u8[4096]{0}', space=vmem, size = 0x1000, scoped, tag = 'input window, operand 0, single buffered']
    #allocation4 [shape = 's32[1]{0}', space=sflag, size = 0x4, scoped, tag = 'scoped memory for tpu_custom_call.1']
    #allocation5 [shape = 's32[1]{0}', space=sflag, size = 0x4, scoped, tag = 'scoped memory for tpu_custom_call.1']
    #allocation6 [shape = 'u8[8192]{0}', space=vmem, size = 0x2000, scoped, tag = 'input window, operand 1, single buffered']
    #allocation7 [shape = 's32[1]{0}', space=sflag, size = 0x4, scoped, tag = 'scoped memory for tpu_custom_call.1']
    #allocation8 [shape = 'u8[262144]{0}', space=vmem, size = 0x40000, scoped, tag = 'input window, operand 3, single buffered']
    #allocation9 [shape = 'u8[512]{0}', space=vmem, size = 0x400, scoped, tag = 'output window, operand 0, single buffered']
    %14 = vsyncpa [#allocation4], 0
    %15 = vsyncpa [#allocation7], 0
    %16 = vsyncpa [#allocation5], 0
    // Predicated region
    $region2: #{tpu_custom_call.1} parent=1 // pred_check
      _
    $region3: #{tpu_custom_call.1} parent=1 // pred_check_branch
      %18 = sbr.rel (0) target = $region5
    $region4: #{tpu_custom_call.1} parent=1 // pred_region
      %s20 = ssub.s32 128, 128
      %21 = vsyncadd [#allocation4], %s20
      %s23 = sshll.u32 [#allocation3], 4
      %s24 = int_to_ptr.vmem [resolvable:$true] %s23
      %26 = dma.hbm_to_vmem [thread:$0]  %s0, 128, %s24, [#allocation4]
    $region5: #{tpu_custom_call.1} parent=1 // pred_fallthru
      _
    // Predicated region
    $region6: #{tpu_custom_call.1} parent=1 // pred_check
      _
    $region7: #{tpu_custom_call.1} parent=1 // pred_check_branch
      %28 = sbr.rel (0) target = $region9
    $region8: #{tpu_custom_call.1} parent=1 // pred_region
      %s30 = ssub.s32 256, 256
      %31 = vsyncadd [#allocation7], %s30
      %s32 = sshll.u32 [#allocation6], 4
      %s33 = int_to_ptr.vmem [resolvable:$true] %s32
      %38 = dma.hbm_to_vmem [thread:$0]  %s1, 256, %s33, [#allocation7], 64, 64, 4
    $region9: #{tpu_custom_call.1} parent=1 // pred_fallthru
      _
    // Predicated region
    $region10: #{tpu_custom_call.1} parent=1 // pred_check
      _
    $region11: #{tpu_custom_call.1} parent=1 // pred_check_branch
      %40 = sbr.rel (0) target = $region13
    $region12: #{tpu_custom_call.1} parent=1 // pred_region
      _
    $region13: #{tpu_custom_call.1} parent=1 // pred_fallthru
      _
    // Predicated region
    $region14: #{tpu_custom_call.1} parent=1 // pred_check
      _
    $region15: #{tpu_custom_call.1} parent=1 // pred_check_branch
      %42 = sbr.rel (0) target = $region17
    $region16: #{tpu_custom_call.1} parent=1 // pred_region
      %s44 = ssub.s32 8192, 8192
      %45 = vsyncadd [#allocation7], %s44
      %s46 = sshll.u32 [#allocation8], 4
      %s47 = int_to_ptr.vmem [resolvable:$true] %s46
      %52 = dma.hbm_to_vmem [thread:$0]  %s3, 8192, %s47, [#allocation7], 64, 64, 4
    $region17: #{tpu_custom_call.1} parent=1 // pred_fallthru
      _
    // Predicated region
    $region18: #{tpu_custom_call.1} parent=1 // pred_check
      _
    $region19: #{tpu_custom_call.1} parent=1 // pred_check_branch
      %54 = sbr.rel (0) target = $region21
    $region20: #{tpu_custom_call.1} parent=1 // pred_region
      _
    $region21: #{tpu_custom_call.1} parent=1 // pred_fallthru
      _
    // Predicated region
    $region22: #{tpu_custom_call.1} parent=1 // pred_check
      _
    $region23: #{tpu_custom_call.1} parent=1 // pred_check_branch
      %56 = sbr.rel (0) target = $region25
    $region24: #{tpu_custom_call.1} parent=1 // pred_region
      _
    $region25: #{tpu_custom_call.1} parent=1 // pred_fallthru
      _
    // Predicated region
    $region26: #{tpu_custom_call.1} parent=1 // pred_check
      _
    $region27: #{tpu_custom_call.1} parent=1 // pred_check_branch
      %58 = sbr.rel (0) target = $region29
    $region28: #{tpu_custom_call.1} parent=1 // pred_region
      _
    $region29: #{tpu_custom_call.1} parent=1 // pred_fallthru
      _
    // Predicated region
    $region30: #{tpu_custom_call.1} parent=1 // pred_check
      _
    $region31: #{tpu_custom_call.1} parent=1 // pred_check_branch
      %60 = sbr.rel (0) target = $region33
    $region32: #{tpu_custom_call.1} parent=1 // pred_region
      %61 = dma.done [#allocation4], 128
    $region33: #{tpu_custom_call.1} parent=1 // pred_fallthru
      _
    // Predicated region
    $region34: #{tpu_custom_call.1} parent=1 // pred_check
      _
    $region35: #{tpu_custom_call.1} parent=1 // pred_check_branch
      %63 = sbr.rel (0) target = $region37
    $region36: #{tpu_custom_call.1} parent=1 // pred_region
      %64 = dma.done [#allocation7], 256
    $region37: #{tpu_custom_call.1} parent=1 // pred_fallthru
      _
    // Predicated region
    $region38: #{tpu_custom_call.1} parent=1 // pred_check
      _
    $region39: #{tpu_custom_call.1} parent=1 // pred_check_branch
      %66 = sbr.rel (0) target = $region41
    $region40: #{tpu_custom_call.1} parent=1 // pred_region
      %67 = dma.done [#allocation7], 8192
    $region41: #{tpu_custom_call.1} parent=1 // pred_fallthru
      _
    %v69 = vld [vmem:[#allocation3] sm:$0xff]
    %v70 = vpack.c.bf16 %v69, %v69
    %v71 = vld [vmem:[#allocation6] sm:$0xf]
    %v72 = vld [vmem:[#allocation6 + $0x4] sm:$0xf]
    %v73 = vld [vmem:[#allocation6 + $0x8] sm:$0xf]
    %v74 = vld [vmem:[#allocation6 + $0xc] sm:$0xf]
    %v75 = vld [vmem:[%s2] sm:$0x1]
    %v77 = vlaneseq
    %v78 = vshrl.u32 %v77, 7
    %v79 = vsub.s32 0, %v78
    %v80 = vrot.slane %v75, %v79
    %v86 = vunpack.c.l.b16 %v71
    %v87 = vunpack.c.l.b16 %v72
    %v88 = vunpack.c.l.b16 %v73
    %v89 = vunpack.c.l.b16 %v74
    %v90 = vpack.c.b16 %v87, %v86
    %v91 = vpack.c.b16 %v89, %v88
    %vm94 = vcmask 261120
    %v96 = vsel %vm94, %v70, 0
    %98 = vmatprep.subr.bf16.mxu0 0
    %99 = vmatpush1.bf16.msra.mxu0 %v90
    %100 = vmatprep.subr.bf16.mxu0 0
    %101 = vmatpush1.bf16.msra.mxu0 %v91
    %102 = vmatprep.subr.bf16.mxu0 0
    %103 = vmatpush1.bf16.msra.mxu0 0
    %104 = vmatprep.subr.bf16.mxu0 0
    %105 = vmatpush1.bf16.msra.mxu0 0
    %106 = vmatprep.subr.bf16.mxu0 0
    %107 = vmatpush1.bf16.msra.mxu0 0
    %108 = vmatprep.subr.bf16.mxu0 0
    %109 = vmatpush1.bf16.msra.mxu0 0
    %110 = vmatprep.subr.bf16.mxu0 0
    %111 = vmatpush1.bf16.msra.mxu0 0
    %112 = vmatprep.subr.bf16.mxu0 0
    %113 = vmatpush1.bf16.msra.mxu0 0
    %114 = vmatprep.subr.bf16.mxu0 0
    %115 = vmatpush1.bf16.msra.mxu0 0
    %116 = vmatprep.subr.bf16.mxu0 0
    %117 = vmatpush1.bf16.msra.mxu0 0
    %118 = vmatprep.subr.bf16.mxu0 0
    %119 = vmatpush1.bf16.msra.mxu0 0
    %120 = vmatprep.subr.bf16.mxu0 0
    %121 = vmatpush1.bf16.msra.mxu0 0
    %122 = vmatprep.subr.bf16.mxu0 0
    %123 = vmatpush1.bf16.msra.mxu0 0
    %124 = vmatprep.subr.bf16.mxu0 0
    %125 = vmatpush1.bf16.msra.mxu0 0
    %126 = vmatprep.subr.bf16.mxu0 0
    %127 = vmatpush1.bf16.msra.mxu0 0
    %128 = vmatprep.subr.bf16.mxu0 0
    %129 = vmatpush1.bf16.msra.mxu0 0
    %130 = vmatprep.mubr.bf16.mxu0 0
    %131 = vmatmul.mubr.bf16.gmra.mrb[0].mxu0 %v96
    %v132 = vpop.f32.mrb[0].mxu0
    %v133 = vadd.f32 %v80, %v132
    %v134 = vpop.f32.mrb[0].mxu0
    %v135 = vpop.f32.mrb[0].mxu0
    %v136 = vpop.f32.mrb[0].mxu0
    %137 = vdwg.mxu0
    %vm138 = vcmp.gt.f32.partialorder %v133, 0.0
    %v139 = vmul.f32 %v133, 0.2
    %v140 = vsel %vm138, %v133, %v139
    %v141 = vpack.c.bf16 %v140, %v140
    %v144 = vunpack.c.l.s4 1966171168
    %v145 = vunpack.c.0.s8 %v144
    %v146 = vlaneseq
    %v147 = vshrl.u32 %v146, 7
    %v148 = vsub.s32 %v145, %v147
    %v149 = vrot.slane %v141, %v148
    %v150 = vcombine.high %v149, %v149
    %v152 = vunpack.c.l.s4 1966171168
    %v153 = vunpack.c.0.s8 %v152
    %v154 = vlaneseq
    %v155 = vshrl.u32 %v154, 7
    %v156 = vsub.s32 %v153, %v155
    %v157 = vrot.slane %v149, %v156
    %v159 = vunpack.c.l.s4 1966171168
    %v160 = vunpack.c.0.s8 %v159
    %v161 = vlaneseq
    %v162 = vshrl.u32 %v161, 7
    %v163 = vsub.s32 %v160, %v162
    %v164 = vrot.slane %v150, %v163
    %v165 = vcombine.high %v157, %v157
    %v166 = vcombine.high %v164, %v164
    %v167 = vunpack.i.l.s16 %v157
    %v168 = vunpack.i.h.s16 %v157
    %v169 = vunpack.i.l.s16 %v164
    %v170 = vunpack.i.h.s16 %v164
    %v171 = vunpack.i.l.s16 %v165
    %v172 = vunpack.i.h.s16 %v165
    %v173 = vunpack.i.l.s16 %v166
    %v174 = vunpack.i.h.s16 %v166
    %v175 = vld [vmem:[#allocation8] sm:$0xf]
    %v176 = vld [vmem:[#allocation8 + $0x4] sm:$0xf]
    %v177 = vld [vmem:[#allocation8 + $0x8] sm:$0xf]
    %v178 = vld [vmem:[#allocation8 + $0xc] sm:$0xf]
    %v179 = vld [vmem:[#allocation8 + $0x10] sm:$0xf]
    %v180 = vld [vmem:[#allocation8 + $0x14] sm:$0xf]
    %v181 = vld [vmem:[#allocation8 + $0x18] sm:$0xf]
    %v182 = vld [vmem:[#allocation8 + $0x1c] sm:$0xf]
    %v183 = vld [vmem:[#allocation8 + $0x20] sm:$0xf]
    %v184 = vld [vmem:[#allocation8 + $0x24] sm:$0xf]
    %v185 = vld [vmem:[#allocation8 + $0x28] sm:$0xf]
    %v186 = vld [vmem:[#allocation8 + $0x2c] sm:$0xf]
    %v187 = vld [vmem:[#allocation8 + $0x30] sm:$0xf]
    %v188 = vld [vmem:[#allocation8 + $0x34] sm:$0xf]
    %v189 = vld [vmem:[#allocation8 + $0x38] sm:$0xf]
    %v190 = vld [vmem:[#allocation8 + $0x3c] sm:$0xf]
    %v191 = vld [vmem:[#allocation8 + $0x40] sm:$0xf]
    %v192 = vld [vmem:[#allocation8 + $0x44] sm:$0xf]
    %v193 = vld [vmem:[#allocation8 + $0x48] sm:$0xf]
    %v194 = vld [vmem:[#allocation8 + $0x4c] sm:$0xf]
    %v195 = vld [vmem:[#allocation8 + $0x50] sm:$0xf]
    %v196 = vld [vmem:[#allocation8 + $0x54] sm:$0xf]
    %v197 = vld [vmem:[#allocation8 + $0x58] sm:$0xf]
    %v198 = vld [vmem:[#allocation8 + $0x5c] sm:$0xf]
    %v199 = vld [vmem:[#allocation8 + $0x60] sm:$0xf]
    %v200 = vld [vmem:[#allocation8 + $0x64] sm:$0xf]
    %v201 = vld [vmem:[#allocation8 + $0x68] sm:$0xf]
    %v202 = vld [vmem:[#allocation8 + $0x6c] sm:$0xf]
    %v203 = vld [vmem:[#allocation8 + $0x70] sm:$0xf]
    %v204 = vld [vmem:[#allocation8 + $0x74] sm:$0xf]
    %v205 = vld [vmem:[#allocation8 + $0x78] sm:$0xf]
    %v206 = vld [vmem:[#allocation8 + $0x7c] sm:$0xf]
    %v207 = vld [vmem:[#allocation8 + $0x80] sm:$0xf]
    %v208 = vld [vmem:[#allocation8 + $0x84] sm:$0xf]
    %v209 = vld [vmem:[#allocation8 + $0x88] sm:$0xf]
    %v210 = vld [vmem:[#allocation8 + $0x8c] sm:$0xf]
    %v211 = vld [vmem:[#allocation8 + $0x90] sm:$0xf]
    %v212 = vld [vmem:[#allocation8 + $0x94] sm:$0xf]
    %v213 = vld [vmem:[#allocation8 + $0x98] sm:$0xf]
    %v214 = vld [vmem:[#allocation8 + $0x9c] sm:$0xf]
    %v215 = vld [vmem:[#allocation8 + $0xa0] sm:$0xf]
    %v216 = vld [vmem:[#allocation8 + $0xa4] sm:$0xf]
    %v217 = vld [vmem:[#allocation8 + $0xa8] sm:$0xf]
    %v218 = vld [vmem:[#allocation8 + $0xac] sm:$0xf]
    %v219 = vld [vmem:[#allocation8 + $0xb0] sm:$0xf]
    %v220 = vld [vmem:[#allocation8 + $0xb4] sm:$0xf]
    %v221 = vld [vmem:[#allocation8 + $0xb8] sm:$0xf]
    %v222 = vld [vmem:[#allocation8 + $0xbc] sm:$0xf]
    %v223 = vld [vmem:[#allocation8 + $0xc0] sm:$0xf]
    %v224 = vld [vmem:[#allocation8 + $0xc4] sm:$0xf]
    %v225 = vld [vmem:[#allocation8 + $0xc8] sm:$0xf]
    %v226 = vld [vmem:[#allocation8 + $0xcc] sm:$0xf]
    %v227 = vld [vmem:[#allocation8 + $0xd0] sm:$0xf]
    %v228 = vld [vmem:[#allocation8 + $0xd4] sm:$0xf]
    %v229 = vld [vmem:[#allocation8 + $0xd8] sm:$0xf]
    %v230 = vld [vmem:[#allocation8 + $0xdc] sm:$0xf]
    %v231 = vld [vmem:[#allocation8 + $0xe0] sm:$0xf]
    %v232 = vld [vmem:[#allocation8 + $0xe4] sm:$0xf]
    %v233 = vld [vmem:[#allocation8 + $0xe8] sm:$0xf]
    %v234 = vld [vmem:[#allocation8 + $0xec] sm:$0xf]
    %v235 = vld [vmem:[#allocation8 + $0xf0] sm:$0xf]
    %v236 = vld [vmem:[#allocation8 + $0xf4] sm:$0xf]
    %v237 = vld [vmem:[#allocation8 + $0xf8] sm:$0xf]
    %v238 = vld [vmem:[#allocation8 + $0xfc] sm:$0xf]
    %v239 = vld [vmem:[#allocation8 + $0x100] sm:$0xf]
    %v240 = vld [vmem:[#allocation8 + $0x104] sm:$0xf]
    %v241 = vld [vmem:[#allocation8 + $0x108] sm:$0xf]
    %v242 = vld [vmem:[#allocation8 + $0x10c] sm:$0xf]
    %v243 = vld [vmem:[#allocation8 + $0x110] sm:$0xf]
    %v244 = vld [vmem:[#allocation8 + $0x114] sm:$0xf]
    %v245 = vld [vmem:[#allocation8 + $0x118] sm:$0xf]
    %v246 = vld [vmem:[#allocation8 + $0x11c] sm:$0xf]
    %v247 = vld [vmem:[#allocation8 + $0x120] sm:$0xf]
    %v248 = vld [vmem:[#allocation8 + $0x124] sm:$0xf]
    %v249 = vld [vmem:[#allocation8 + $0x128] sm:$0xf]
    %v250 = vld [vmem:[#allocation8 + $0x12c] sm:$0xf]
    %v251 = vld [vmem:[#allocation8 + $0x130] sm:$0xf]
    %v252 = vld [vmem:[#allocation8 + $0x134] sm:$0xf]
    %v253 = vld [vmem:[#allocation8 + $0x138] sm:$0xf]
    %v254 = vld [vmem:[#allocation8 + $0x13c] sm:$0xf]
    %v255 = vld [vmem:[#allocation8 + $0x140] sm:$0xf]
    %v256 = vld [vmem:[#allocation8 + $0x144] sm:$0xf]
    %v257 = vld [vmem:[#allocation8 + $0x148] sm:$0xf]
    %v258 = vld [vmem:[#allocation8 + $0x14c] sm:$0xf]
    %v259 = vld [vmem:[#allocation8 + $0x150] sm:$0xf]
    %v260 = vld [vmem:[#allocation8 + $0x154] sm:$0xf]
    %v261 = vld [vmem:[#allocation8 + $0x158] sm:$0xf]
    %v262 = vld [vmem:[#allocation8 + $0x15c] sm:$0xf]
    %v263 = vld [vmem:[#allocation8 + $0x160] sm:$0xf]
    %v264 = vld [vmem:[#allocation8 + $0x164] sm:$0xf]
    %v265 = vld [vmem:[#allocation8 + $0x168] sm:$0xf]
    %v266 = vld [vmem:[#allocation8 + $0x16c] sm:$0xf]
    %v267 = vld [vmem:[#allocation8 + $0x170] sm:$0xf]
    %v268 = vld [vmem:[#allocation8 + $0x174] sm:$0xf]
    %v269 = vld [vmem:[#allocation8 + $0x178] sm:$0xf]
    %v270 = vld [vmem:[#allocation8 + $0x17c] sm:$0xf]
    %v271 = vld [vmem:[#allocation8 + $0x180] sm:$0xf]
    %v272 = vld [vmem:[#allocation8 + $0x184] sm:$0xf]
    %v273 = vld [vmem:[#allocation8 + $0x188] sm:$0xf]
    %v274 = vld [vmem:[#allocation8 + $0x18c] sm:$0xf]
    %v275 = vld [vmem:[#allocation8 + $0x190] sm:$0xf]
    %v276 = vld [vmem:[#allocation8 + $0x194] sm:$0xf]
    %v277 = vld [vmem:[#allocation8 + $0x198] sm:$0xf]
    %v278 = vld [vmem:[#allocation8 + $0x19c] sm:$0xf]
    %v279 = vld [vmem:[#allocation8 + $0x1a0] sm:$0xf]
    %v280 = vld [vmem:[#allocation8 + $0x1a4] sm:$0xf]
    %v281 = vld [vmem:[#allocation8 + $0x1a8] sm:$0xf]
    %v282 = vld [vmem:[#allocation8 + $0x1ac] sm:$0xf]
    %v283 = vld [vmem:[#allocation8 + $0x1b0] sm:$0xf]
    %v284 = vld [vmem:[#allocation8 + $0x1b4] sm:$0xf]
    %v285 = vld [vmem:[#allocation8 + $0x1b8] sm:$0xf]
    %v286 = vld [vmem:[#allocation8 + $0x1bc] sm:$0xf]
    %v287 = vld [vmem:[#allocation8 + $0x1c0] sm:$0xf]
    %v288 = vld [vmem:[#allocation8 + $0x1c4] sm:$0xf]
    %v289 = vld [vmem:[#allocation8 + $0x1c8] sm:$0xf]
    %v290 = vld [vmem:[#allocation8 + $0x1cc] sm:$0xf]
    %v291 = vld [vmem:[#allocation8 + $0x1d0] sm:$0xf]
    %v292 = vld [vmem:[#allocation8 + $0x1d4] sm:$0xf]
    %v293 = vld [vmem:[#allocation8 + $0x1d8] sm:$0xf]
    %v294 = vld [vmem:[#allocation8 + $0x1dc] sm:$0xf]
    %v295 = vld [vmem:[#allocation8 + $0x1e0] sm:$0xf]
    %v296 = vld [vmem:[#allocation8 + $0x1e4] sm:$0xf]
    %v297 = vld [vmem:[#allocation8 + $0x1e8] sm:$0xf]
    %v298 = vld [vmem:[#allocation8 + $0x1ec] sm:$0xf]
    %v299 = vld [vmem:[#allocation8 + $0x1f0] sm:$0xf]
    %v300 = vld [vmem:[#allocation8 + $0x1f4] sm:$0xf]
    %v301 = vld [vmem:[#allocation8 + $0x1f8] sm:$0xf]
    %v302 = vld [vmem:[#allocation8 + $0x1fc] sm:$0xf]
    %v303 = vpack.i.b16 %v167, %v167
    %v304 = vlaneseq
    %v305 = vshrl.u32 %v304, 7
    %v306 = vsub.s32 0, %v305
    %v307 = vrot.slane %v303, %v306
    %v325 = vunpack.c.l.b16 %v175
    %v326 = vunpack.c.l.b16 %v176
    %v327 = vunpack.c.l.b16 %v177
    %v328 = vunpack.c.l.b16 %v178
    %v329 = vunpack.c.l.b16 %v179
    %v330 = vunpack.c.l.b16 %v180
    %v331 = vunpack.c.l.b16 %v181
    %v332 = vunpack.c.l.b16 %v182
    %v333 = vunpack.c.l.b16 %v183
    %v334 = vunpack.c.l.b16 %v184
    %v335 = vunpack.c.l.b16 %v185
    %v336 = vunpack.c.l.b16 %v186
    %v337 = vunpack.c.l.b16 %v187
    %v338 = vunpack.c.l.b16 %v188
    %v339 = vunpack.c.l.b16 %v189
    %v340 = vunpack.c.l.b16 %v190
    %v341 = vpack.c.b16 %v326, %v325
    %v342 = vpack.c.b16 %v328, %v327
    %v343 = vpack.c.b16 %v330, %v329
    %v344 = vpack.c.b16 %v332, %v331
    %v345 = vpack.c.b16 %v334, %v333
    %v346 = vpack.c.b16 %v336, %v335
    %v347 = vpack.c.b16 %v338, %v337
    %v348 = vpack.c.b16 %v340, %v339
    %357 = vmatprep.subr.bf16.mxu0 0
    %358 = vmatpush1.bf16.msra.mxu0 %v341
    %359 = vmatprep.subr.bf16.mxu0 0
    %360 = vmatpush1.bf16.msra.mxu0 %v342
    %361 = vmatprep.subr.bf16.mxu0 0
    %362 = vmatpush1.bf16.msra.mxu0 %v343
    %363 = vmatprep.subr.bf16.mxu0 0
    %364 = vmatpush1.bf16.msra.mxu0 %v344
    %365 = vmatprep.subr.bf16.mxu0 0
    %366 = vmatpush1.bf16.msra.mxu0 %v345
    %367 = vmatprep.subr.bf16.mxu0 0
    %368 = vmatpush1.bf16.msra.mxu0 %v346
    %369 = vmatprep.subr.bf16.mxu0 0
    %370 = vmatpush1.bf16.msra.mxu0 %v347
    %371 = vmatprep.subr.bf16.mxu0 0
    %372 = vmatpush1.bf16.msra.mxu0 %v348
    %373 = vmatprep.subr.bf16.mxu0 0
    %374 = vmatpush1.bf16.msra.mxu0 0
    %375 = vmatprep.subr.bf16.mxu0 0
    %376 = vmatpush1.bf16.msra.mxu0 0
    %377 = vmatprep.subr.bf16.mxu0 0
    %378 = vmatpush1.bf16.msra.mxu0 0
    %379 = vmatprep.subr.bf16.mxu0 0
    %380 = vmatpush1.bf16.msra.mxu0 0
    %381 = vmatprep.subr.bf16.mxu0 0
    %382 = vmatpush1.bf16.msra.mxu0 0
    %383 = vmatprep.subr.bf16.mxu0 0
    %384 = vmatpush1.bf16.msra.mxu0 0
    %385 = vmatprep.subr.bf16.mxu0 0
    %386 = vmatpush1.bf16.msra.mxu0 0
    %387 = vmatprep.subr.bf16.mxu0 0
    %388 = vmatpush1.bf16.msra.mxu0 0
    %389 = vmatprep.mubr.bf16.mxu0 0
    %390 = vmatmul.mubr.bf16.gmra.mrb[0].mxu0 %v307
    %v391 = vpop.f32.mrb[0].mxu0
    %v392 = vadd.f32 0.0, %v391
    %v393 = vpop.f32.mrb[0].mxu0
    %v394 = vpop.f32.mrb[0].mxu0
    %v395 = vpop.f32.mrb[0].mxu0
    %396 = vdwg.mxu0
    %v397 = vpack.i.b16 %v168, %v168
    %v398 = vlaneseq
    %v399 = vshrl.u32 %v398, 7
    %v400 = vsub.s32 0, %v399
    %v401 = vrot.slane %v397, %v400
    %v419 = vunpack.c.l.b16 %v191
    %v420 = vunpack.c.l.b16 %v192
    %v421 = vunpack.c.l.b16 %v193
    %v422 = vunpack.c.l.b16 %v194
    %v423 = vunpack.c.l.b16 %v195
    %v424 = vunpack.c.l.b16 %v196
    %v425 = vunpack.c.l.b16 %v197
    %v426 = vunpack.c.l.b16 %v198
    %v427 = vunpack.c.l.b16 %v199
    %v428 = vunpack.c.l.b16 %v200
    %v429 = vunpack.c.l.b16 %v201
    %v430 = vunpack.c.l.b16 %v202
    %v431 = vunpack.c.l.b16 %v203
    %v432 = vunpack.c.l.b16 %v204
    %v433 = vunpack.c.l.b16 %v205
    %v434 = vunpack.c.l.b16 %v206
    %v435 = vpack.c.b16 %v420, %v419
    %v436 = vpack.c.b16 %v422, %v421
    %v437 = vpack.c.b16 %v424, %v423
    %v438 = vpack.c.b16 %v426, %v425
    %v439 = vpack.c.b16 %v428, %v427
    %v440 = vpack.c.b16 %v430, %v429
    %v441 = vpack.c.b16 %v432, %v431
    %v442 = vpack.c.b16 %v434, %v433
    %451 = vmatprep.subr.bf16.mxu0 0
    %452 = vmatpush1.bf16.msra.mxu0 %v435
    %453 = vmatprep.subr.bf16.mxu0 0
    %454 = vmatpush1.bf16.msra.mxu0 %v436
    %455 = vmatprep.subr.bf16.mxu0 0
    %456 = vmatpush1.bf16.msra.mxu0 %v437
    %457 = vmatprep.subr.bf16.mxu0 0
    %458 = vmatpush1.bf16.msra.mxu0 %v438
    %459 = vmatprep.subr.bf16.mxu0 0
    %460 = vmatpush1.bf16.msra.mxu0 %v439
    %461 = vmatprep.subr.bf16.mxu0 0
    %462 = vmatpush1.bf16.msra.mxu0 %v440
    %463 = vmatprep.subr.bf16.mxu0 0
    %464 = vmatpush1.bf16.msra.mxu0 %v441
    %465 = vmatprep.subr.bf16.mxu0 0
    %466 = vmatpush1.bf16.msra.mxu0 %v442
    %467 = vmatprep.subr.bf16.mxu0 0
    %468 = vmatpush1.bf16.msra.mxu0 0
    %469 = vmatprep.subr.bf16.mxu0 0
    %470 = vmatpush1.bf16.msra.mxu0 0
    %471 = vmatprep.subr.bf16.mxu0 0
    %472 = vmatpush1.bf16.msra.mxu0 0
    %473 = vmatprep.subr.bf16.mxu0 0
    %474 = vmatpush1.bf16.msra.mxu0 0
    %475 = vmatprep.subr.bf16.mxu0 0
    %476 = vmatpush1.bf16.msra.mxu0 0
    %477 = vmatprep.subr.bf16.mxu0 0
    %478 = vmatpush1.bf16.msra.mxu0 0
    %479 = vmatprep.subr.bf16.mxu0 0
    %480 = vmatpush1.bf16.msra.mxu0 0
    %481 = vmatprep.subr.bf16.mxu0 0
    %482 = vmatpush1.bf16.msra.mxu0 0
    %483 = vmatprep.mubr.bf16.mxu0 0
    %484 = vmatmul.mubr.bf16.gmra.mrb[0].mxu0 %v401
    %v485 = vpop.f32.mrb[0].mxu0
    %v486 = vadd.f32 0.0, %v485
    %v487 = vpop.f32.mrb[0].mxu0
    %v488 = vpop.f32.mrb[0].mxu0
    %v489 = vpop.f32.mrb[0].mxu0
    %490 = vdwg.mxu0
    %v491 = vpack.i.b16 %v169, %v169
    %v492 = vlaneseq
    %v493 = vshrl.u32 %v492, 7
    %v494 = vsub.s32 0, %v493
    %v495 = vrot.slane %v491, %v494
    %v513 = vunpack.c.l.b16 %v207
    %v514 = vunpack.c.l.b16 %v208
    %v515 = vunpack.c.l.b16 %v209
    %v516 = vunpack.c.l.b16 %v210
    %v517 = vunpack.c.l.b16 %v211
    %v518 = vunpack.c.l.b16 %v212
    %v519 = vunpack.c.l.b16 %v213
    %v520 = vunpack.c.l.b16 %v214
    %v521 = vunpack.c.l.b16 %v215
    %v522 = vunpack.c.l.b16 %v216
    %v523 = vunpack.c.l.b16 %v217
    %v524 = vunpack.c.l.b16 %v218
    %v525 = vunpack.c.l.b16 %v219
    %v526 = vunpack.c.l.b16 %v220
    %v527 = vunpack.c.l.b16 %v221
    %v528 = vunpack.c.l.b16 %v222
    %v529 = vpack.c.b16 %v514, %v513
    %v530 = vpack.c.b16 %v516, %v515
    %v531 = vpack.c.b16 %v518, %v517
    %v532 = vpack.c.b16 %v520, %v519
    %v533 = vpack.c.b16 %v522, %v521
    %v534 = vpack.c.b16 %v524, %v523
    %v535 = vpack.c.b16 %v526, %v525
    %v536 = vpack.c.b16 %v528, %v527
    %545 = vmatprep.subr.bf16.mxu0 0
    %546 = vmatpush1.bf16.msra.mxu0 %v529
    %547 = vmatprep.subr.bf16.mxu0 0
    %548 = vmatpush1.bf16.msra.mxu0 %v530
    %549 = vmatprep.subr.bf16.mxu0 0
    %550 = vmatpush1.bf16.msra.mxu0 %v531
    %551 = vmatprep.subr.bf16.mxu0 0
    %552 = vmatpush1.bf16.msra.mxu0 %v532
    %553 = vmatprep.subr.bf16.mxu0 0
    %554 = vmatpush1.bf16.msra.mxu0 %v533
    %555 = vmatprep.subr.bf16.mxu0 0
    %556 = vmatpush1.bf16.msra.mxu0 %v534
    %557 = vmatprep.subr.bf16.mxu0 0
    %558 = vmatpush1.bf16.msra.mxu0 %v535
    %559 = vmatprep.subr.bf16.mxu0 0
    %560 = vmatpush1.bf16.msra.mxu0 %v536
    %561 = vmatprep.subr.bf16.mxu0 0
    %562 = vmatpush1.bf16.msra.mxu0 0
    %563 = vmatprep.subr.bf16.mxu0 0
    %564 = vmatpush1.bf16.msra.mxu0 0
    %565 = vmatprep.subr.bf16.mxu0 0
    %566 = vmatpush1.bf16.msra.mxu0 0
    %567 = vmatprep.subr.bf16.mxu0 0
    %568 = vmatpush1.bf16.msra.mxu0 0
    %569 = vmatprep.subr.bf16.mxu0 0
    %570 = vmatpush1.bf16.msra.mxu0 0
    %571 = vmatprep.subr.bf16.mxu0 0
    %572 = vmatpush1.bf16.msra.mxu0 0
    %573 = vmatprep.subr.bf16.mxu0 0
    %574 = vmatpush1.bf16.msra.mxu0 0
    %575 = vmatprep.subr.bf16.mxu0 0
    %576 = vmatpush1.bf16.msra.mxu0 0
    %577 = vmatprep.mubr.bf16.mxu0 0
    %578 = vmatmul.mubr.bf16.gmra.mrb[0].mxu0 %v495
    %v579 = vpop.f32.mrb[0].mxu0
    %v580 = vadd.f32 0.0, %v579
    %v581 = vpop.f32.mrb[0].mxu0
    %v582 = vpop.f32.mrb[0].mxu0
    %v583 = vpop.f32.mrb[0].mxu0
    %584 = vdwg.mxu0
    %v585 = vpack.i.b16 %v170, %v170
    %v586 = vlaneseq
    %v587 = vshrl.u32 %v586, 7
    %v588 = vsub.s32 0, %v587
    %v589 = vrot.slane %v585, %v588
    %v607 = vunpack.c.l.b16 %v223
    %v608 = vunpack.c.l.b16 %v224
    %v609 = vunpack.c.l.b16 %v225
    %v610 = vunpack.c.l.b16 %v226
    %v611 = vunpack.c.l.b16 %v227
    %v612 = vunpack.c.l.b16 %v228
    %v613 = vunpack.c.l.b16 %v229
    %v614 = vunpack.c.l.b16 %v230
    %v615 = vunpack.c.l.b16 %v231
    %v616 = vunpack.c.l.b16 %v232
    %v617 = vunpack.c.l.b16 %v233
    %v618 = vunpack.c.l.b16 %v234
    %v619 = vunpack.c.l.b16 %v235
    %v620 = vunpack.c.l.b16 %v236
    %v621 = vunpack.c.l.b16 %v237
    %v622 = vunpack.c.l.b16 %v238
    %v623 = vpack.c.b16 %v608, %v607
    %v624 = vpack.c.b16 %v610, %v609
    %v625 = vpack.c.b16 %v612, %v611
    %v626 = vpack.c.b16 %v614, %v613
    %v627 = vpack.c.b16 %v616, %v615
    %v628 = vpack.c.b16 %v618, %v617
    %v629 = vpack.c.b16 %v620, %v619
    %v630 = vpack.c.b16 %v622, %v621
    %639 = vmatprep.subr.bf16.mxu0 0
    %640 = vmatpush1.bf16.msra.mxu0 %v623
    %641 = vmatprep.subr.bf16.mxu0 0
    %642 = vmatpush1.bf16.msra.mxu0 %v624
    %643 = vmatprep.subr.bf16.mxu0 0
    %644 = vmatpush1.bf16.msra.mxu0 %v625
    %645 = vmatprep.subr.bf16.mxu0 0
    %646 = vmatpush1.bf16.msra.mxu0 %v626
    %647 = vmatprep.subr.bf16.mxu0 0
    %648 = vmatpush1.bf16.msra.mxu0 %v627
    %649 = vmatprep.subr.bf16.mxu0 0
    %650 = vmatpush1.bf16.msra.mxu0 %v628
    %651 = vmatprep.subr.bf16.mxu0 0
    %652 = vmatpush1.bf16.msra.mxu0 %v629
    %653 = vmatprep.subr.bf16.mxu0 0
    %654 = vmatpush1.bf16.msra.mxu0 %v630
    %655 = vmatprep.subr.bf16.mxu0 0
    %656 = vmatpush1.bf16.msra.mxu0 0
    %657 = vmatprep.subr.bf16.mxu0 0
    %658 = vmatpush1.bf16.msra.mxu0 0
    %659 = vmatprep.subr.bf16.mxu0 0
    %660 = vmatpush1.bf16.msra.mxu0 0
    %661 = vmatprep.subr.bf16.mxu0 0
    %662 = vmatpush1.bf16.msra.mxu0 0
    %663 = vmatprep.subr.bf16.mxu0 0
    %664 = vmatpush1.bf16.msra.mxu0 0
    %665 = vmatprep.subr.bf16.mxu0 0
    %666 = vmatpush1.bf16.msra.mxu0 0
    %667 = vmatprep.subr.bf16.mxu0 0
    %668 = vmatpush1.bf16.msra.mxu0 0
    %669 = vmatprep.subr.bf16.mxu0 0
    %670 = vmatpush1.bf16.msra.mxu0 0
    %671 = vmatprep.mubr.bf16.mxu0 0
    %672 = vmatmul.mubr.bf16.gmra.mrb[0].mxu0 %v589
    %v673 = vpop.f32.mrb[0].mxu0
    %v674 = vadd.f32 0.0, %v673
    %v675 = vpop.f32.mrb[0].mxu0
    %v676 = vpop.f32.mrb[0].mxu0
    %v677 = vpop.f32.mrb[0].mxu0
    %678 = vdwg.mxu0
    %v679 = vpack.i.b16 %v171, %v171
    %v680 = vlaneseq
    %v681 = vshrl.u32 %v680, 7
    %v682 = vsub.s32 0, %v681
    %v683 = vrot.slane %v679, %v682
    %v701 = vunpack.c.l.b16 %v239
    %v702 = vunpack.c.l.b16 %v240
    %v703 = vunpack.c.l.b16 %v241
    %v704 = vunpack.c.l.b16 %v242
    %v705 = vunpack.c.l.b16 %v243
    %v706 = vunpack.c.l.b16 %v244
    %v707 = vunpack.c.l.b16 %v245
    %v708 = vunpack.c.l.b16 %v246
    %v709 = vunpack.c.l.b16 %v247
    %v710 = vunpack.c.l.b16 %v248
    %v711 = vunpack.c.l.b16 %v249
    %v712 = vunpack.c.l.b16 %v250
    %v713 = vunpack.c.l.b16 %v251
    %v714 = vunpack.c.l.b16 %v252
    %v715 = vunpack.c.l.b16 %v253
    %v716 = vunpack.c.l.b16 %v254
    %v717 = vpack.c.b16 %v702, %v701
    %v718 = vpack.c.b16 %v704, %v703
    %v719 = vpack.c.b16 %v706, %v705
    %v720 = vpack.c.b16 %v708, %v707
    %v721 = vpack.c.b16 %v710, %v709
    %v722 = vpack.c.b16 %v712, %v711
    %v723 = vpack.c.b16 %v714, %v713
    %v724 = vpack.c.b16 %v716, %v715
    %733 = vmatprep.subr.bf16.mxu0 0
    %734 = vmatpush1.bf16.msra.mxu0 %v717
    %735 = vmatprep.subr.bf16.mxu0 0
    %736 = vmatpush1.bf16.msra.mxu0 %v718
    %737 = vmatprep.subr.bf16.mxu0 0
    %738 = vmatpush1.bf16.msra.mxu0 %v719
    %739 = vmatprep.subr.bf16.mxu0 0
    %740 = vmatpush1.bf16.msra.mxu0 %v720
    %741 = vmatprep.subr.bf16.mxu0 0
    %742 = vmatpush1.bf16.msra.mxu0 %v721
    %743 = vmatprep.subr.bf16.mxu0 0
    %744 = vmatpush1.bf16.msra.mxu0 %v722
    %745 = vmatprep.subr.bf16.mxu0 0
    %746 = vmatpush1.bf16.msra.mxu0 %v723
    %747 = vmatprep.subr.bf16.mxu0 0
    %748 = vmatpush1.bf16.msra.mxu0 %v724
    %749 = vmatprep.subr.bf16.mxu0 0
    %750 = vmatpush1.bf16.msra.mxu0 0
    %751 = vmatprep.subr.bf16.mxu0 0
    %752 = vmatpush1.bf16.msra.mxu0 0
    %753 = vmatprep.subr.bf16.mxu0 0
    %754 = vmatpush1.bf16.msra.mxu0 0
    %755 = vmatprep.subr.bf16.mxu0 0
    %756 = vmatpush1.bf16.msra.mxu0 0
    %757 = vmatprep.subr.bf16.mxu0 0
    %758 = vmatpush1.bf16.msra.mxu0 0
    %759 = vmatprep.subr.bf16.mxu0 0
    %760 = vmatpush1.bf16.msra.mxu0 0
    %761 = vmatprep.subr.bf16.mxu0 0
    %762 = vmatpush1.bf16.msra.mxu0 0
    %763 = vmatprep.subr.bf16.mxu0 0
    %764 = vmatpush1.bf16.msra.mxu0 0
    %765 = vmatprep.mubr.bf16.mxu0 0
    %766 = vmatmul.mubr.bf16.gmra.mrb[0].mxu0 %v683
    %v767 = vpop.f32.mrb[0].mxu0
    %v768 = vadd.f32 0.0, %v767
    %v769 = vpop.f32.mrb[0].mxu0
    %v770 = vpop.f32.mrb[0].mxu0
    %v771 = vpop.f32.mrb[0].mxu0
    %772 = vdwg.mxu0
    %v773 = vpack.i.b16 %v172, %v172
    %v774 = vlaneseq
    %v775 = vshrl.u32 %v774, 7
    %v776 = vsub.s32 0, %v775
    %v777 = vrot.slane %v773, %v776
    %v795 = vunpack.c.l.b16 %v255
    %v796 = vunpack.c.l.b16 %v256
    %v797 = vunpack.c.l.b16 %v257
    %v798 = vunpack.c.l.b16 %v258
    %v799 = vunpack.c.l.b16 %v259
    %v800 = vunpack.c.l.b16 %v260
    %v801 = vunpack.c.l.b16 %v261
    %v802 = vunpack.c.l.b16 %v262
    %v803 = vunpack.c.l.b16 %v263
    %v804 = vunpack.c.l.b16 %v264
    %v805 = vunpack.c.l.b16 %v265
    %v806 = vunpack.c.l.b16 %v266
    %v807 = vunpack.c.l.b16 %v267
    %v808 = vunpack.c.l.b16 %v268
    %v809 = vunpack.c.l.b16 %v269
    %v810 = vunpack.c.l.b16 %v270
    %v811 = vpack.c.b16 %v796, %v795
    %v812 = vpack.c.b16 %v798, %v797
    %v813 = vpack.c.b16 %v800, %v799
    %v814 = vpack.c.b16 %v802, %v801
    %v815 = vpack.c.b16 %v804, %v803
    %v816 = vpack.c.b16 %v806, %v805
    %v817 = vpack.c.b16 %v808, %v807
    %v818 = vpack.c.b16 %v810, %v809
    %827 = vmatprep.subr.bf16.mxu0 0
    %828 = vmatpush1.bf16.msra.mxu0 %v811
    %829 = vmatprep.subr.bf16.mxu0 0
    %830 = vmatpush1.bf16.msra.mxu0 %v812
    %831 = vmatprep.subr.bf16.mxu0 0
    %832 = vmatpush1.bf16.msra.mxu0 %v813
    %833 = vmatprep.subr.bf16.mxu0 0
    %834 = vmatpush1.bf16.msra.mxu0 %v814
    %835 = vmatprep.subr.bf16.mxu0 0
    %836 = vmatpush1.bf16.msra.mxu0 %v815
    %837 = vmatprep.subr.bf16.mxu0 0
    %838 = vmatpush1.bf16.msra.mxu0 %v816
    %839 = vmatprep.subr.bf16.mxu0 0
    %840 = vmatpush1.bf16.msra.mxu0 %v817
    %841 = vmatprep.subr.bf16.mxu0 0
    %842 = vmatpush1.bf16.msra.mxu0 %v818
    %843 = vmatprep.subr.bf16.mxu0 0
    %844 = vmatpush1.bf16.msra.mxu0 0
    %845 = vmatprep.subr.bf16.mxu0 0
    %846 = vmatpush1.bf16.msra.mxu0 0
    %847 = vmatprep.subr.bf16.mxu0 0
    %848 = vmatpush1.bf16.msra.mxu0 0
    %849 = vmatprep.subr.bf16.mxu0 0
    %850 = vmatpush1.bf16.msra.mxu0 0
    %851 = vmatprep.subr.bf16.mxu0 0
    %852 = vmatpush1.bf16.msra.mxu0 0
    %853 = vmatprep.subr.bf16.mxu0 0
    %854 = vmatpush1.bf16.msra.mxu0 0
    %855 = vmatprep.subr.bf16.mxu0 0
    %856 = vmatpush1.bf16.msra.mxu0 0
    %857 = vmatprep.subr.bf16.mxu0 0
    %858 = vmatpush1.bf16.msra.mxu0 0
    %859 = vmatprep.mubr.bf16.mxu0 0
    %860 = vmatmul.mubr.bf16.gmra.mrb[0].mxu0 %v777
    %v861 = vpop.f32.mrb[0].mxu0
    %v862 = vadd.f32 0.0, %v861
    %v863 = vpop.f32.mrb[0].mxu0
    %v864 = vpop.f32.mrb[0].mxu0
    %v865 = vpop.f32.mrb[0].mxu0
    %866 = vdwg.mxu0
    %v867 = vpack.i.b16 %v173, %v173
    %v868 = vlaneseq
    %v869 = vshrl.u32 %v868, 7
    %v870 = vsub.s32 0, %v869
    %v871 = vrot.slane %v867, %v870
    %v889 = vunpack.c.l.b16 %v271
    %v890 = vunpack.c.l.b16 %v272
    %v891 = vunpack.c.l.b16 %v273
    %v892 = vunpack.c.l.b16 %v274
    %v893 = vunpack.c.l.b16 %v275
    %v894 = vunpack.c.l.b16 %v276
    %v895 = vunpack.c.l.b16 %v277
    %v896 = vunpack.c.l.b16 %v278
    %v897 = vunpack.c.l.b16 %v279
    %v898 = vunpack.c.l.b16 %v280
    %v899 = vunpack.c.l.b16 %v281
    %v900 = vunpack.c.l.b16 %v282
    %v901 = vunpack.c.l.b16 %v283
    %v902 = vunpack.c.l.b16 %v284
    %v903 = vunpack.c.l.b16 %v285
    %v904 = vunpack.c.l.b16 %v286
    %v905 = vpack.c.b16 %v890, %v889
    %v906 = vpack.c.b16 %v892, %v891
    %v907 = vpack.c.b16 %v894, %v893
    %v908 = vpack.c.b16 %v896, %v895
    %v909 = vpack.c.b16 %v898, %v897
    %v910 = vpack.c.b16 %v900, %v899
    %v911 = vpack.c.b16 %v902, %v901
    %v912 = vpack.c.b16 %v904, %v903
    %921 = vmatprep.subr.bf16.mxu0 0
    %922 = vmatpush1.bf16.msra.mxu0 %v905
    %923 = vmatprep.subr.bf16.mxu0 0
    %924 = vmatpush1.bf16.msra.mxu0 %v906
    %925 = vmatprep.subr.bf16.mxu0 0
    %926 = vmatpush1.bf16.msra.mxu0 %v907
    %927 = vmatprep.subr.bf16.mxu0 0
    %928 = vmatpush1.bf16.msra.mxu0 %v908
    %929 = vmatprep.subr.bf16.mxu0 0
    %930 = vmatpush1.bf16.msra.mxu0 %v909
    %931 = vmatprep.subr.bf16.mxu0 0
    %932 = vmatpush1.bf16.msra.mxu0 %v910
    %933 = vmatprep.subr.bf16.mxu0 0
    %934 = vmatpush1.bf16.msra.mxu0 %v911
    %935 = vmatprep.subr.bf16.mxu0 0
    %936 = vmatpush1.bf16.msra.mxu0 %v912
    %937 = vmatprep.subr.bf16.mxu0 0
    %938 = vmatpush1.bf16.msra.mxu0 0
    %939 = vmatprep.subr.bf16.mxu0 0
    %940 = vmatpush1.bf16.msra.mxu0 0
    %941 = vmatprep.subr.bf16.mxu0 0
    %942 = vmatpush1.bf16.msra.mxu0 0
    %943 = vmatprep.subr.bf16.mxu0 0
    %944 = vmatpush1.bf16.msra.mxu0 0
    %945 = vmatprep.subr.bf16.mxu0 0
    %946 = vmatpush1.bf16.msra.mxu0 0
    %947 = vmatprep.subr.bf16.mxu0 0
    %948 = vmatpush1.bf16.msra.mxu0 0
    %949 = vmatprep.subr.bf16.mxu0 0
    %950 = vmatpush1.bf16.msra.mxu0 0
    %951 = vmatprep.subr.bf16.mxu0 0
    %952 = vmatpush1.bf16.msra.mxu0 0
    %953 = vmatprep.mubr.bf16.mxu0 0
    %954 = vmatmul.mubr.bf16.gmra.mrb[0].mxu0 %v871
    %v955 = vpop.f32.mrb[0].mxu0
    %v956 = vadd.f32 0.0, %v955
    %v957 = vpop.f32.mrb[0].mxu0
    %v958 = vpop.f32.mrb[0].mxu0
    %v959 = vpop.f32.mrb[0].mxu0
    %960 = vdwg.mxu0
    %v961 = vpack.i.b16 %v174, %v174
    %v962 = vlaneseq
    %v963 = vshrl.u32 %v962, 7
    %v964 = vsub.s32 0, %v963
    %v965 = vrot.slane %v961, %v964
    %v983 = vunpack.c.l.b16 %v287
    %v984 = vunpack.c.l.b16 %v288
    %v985 = vunpack.c.l.b16 %v289
    %v986 = vunpack.c.l.b16 %v290
    %v987 = vunpack.c.l.b16 %v291
    %v988 = vunpack.c.l.b16 %v292
    %v989 = vunpack.c.l.b16 %v293
    %v990 = vunpack.c.l.b16 %v294
    %v991 = vunpack.c.l.b16 %v295
    %v992 = vunpack.c.l.b16 %v296
    %v993 = vunpack.c.l.b16 %v297
    %v994 = vunpack.c.l.b16 %v298
    %v995 = vunpack.c.l.b16 %v299
    %v996 = vunpack.c.l.b16 %v300
    %v997 = vunpack.c.l.b16 %v301
    %v998 = vunpack.c.l.b16 %v302
    %v999 = vpack.c.b16 %v984, %v983
    %v1000 = vpack.c.b16 %v986, %v985
    %v1001 = vpack.c.b16 %v988, %v987
    %v1002 = vpack.c.b16 %v990, %v989
    %v1003 = vpack.c.b16 %v992, %v991
    %v1004 = vpack.c.b16 %v994, %v993
    %v1005 = vpack.c.b16 %v996, %v995
    %v1006 = vpack.c.b16 %v998, %v997
    %1015 = vmatprep.subr.bf16.mxu0 0
    %1016 = vmatpush1.bf16.msra.mxu0 %v999
    %1017 = vmatprep.subr.bf16.mxu0 0
    %1018 = vmatpush1.bf16.msra.mxu0 %v1000
    %1019 = vmatprep.subr.bf16.mxu0 0
    %1020 = vmatpush1.bf16.msra.mxu0 %v1001
    %1021 = vmatprep.subr.bf16.mxu0 0
    %1022 = vmatpush1.bf16.msra.mxu0 %v1002
    %1023 = vmatprep.subr.bf16.mxu0 0
    %1024 = vmatpush1.bf16.msra.mxu0 %v1003
    %1025 = vmatprep.subr.bf16.mxu0 0
    %1026 = vmatpush1.bf16.msra.mxu0 %v1004
    %1027 = vmatprep.subr.bf16.mxu0 0
    %1028 = vmatpush1.bf16.msra.mxu0 %v1005
    %1029 = vmatprep.subr.bf16.mxu0 0
    %1030 = vmatpush1.bf16.msra.mxu0 %v1006
    %1031 = vmatprep.subr.bf16.mxu0 0
    %1032 = vmatpush1.bf16.msra.mxu0 0
    %1033 = vmatprep.subr.bf16.mxu0 0
    %1034 = vmatpush1.bf16.msra.mxu0 0
    %1035 = vmatprep.subr.bf16.mxu0 0
    %1036 = vmatpush1.bf16.msra.mxu0 0
    %1037 = vmatprep.subr.bf16.mxu0 0
    %1038 = vmatpush1.bf16.msra.mxu0 0
    %1039 = vmatprep.subr.bf16.mxu0 0
    %1040 = vmatpush1.bf16.msra.mxu0 0
    %1041 = vmatprep.subr.bf16.mxu0 0
    %1042 = vmatpush1.bf16.msra.mxu0 0
    %1043 = vmatprep.subr.bf16.mxu0 0
    %1044 = vmatpush1.bf16.msra.mxu0 0
    %1045 = vmatprep.subr.bf16.mxu0 0
    %1046 = vmatpush1.bf16.msra.mxu0 0
    %1047 = vmatprep.mubr.bf16.mxu0 0
    %1048 = vmatmul.mubr.bf16.gmra.mrb[0].mxu0 %v965
    %v1049 = vpop.f32.mrb[0].mxu0
    %v1050 = vadd.f32 0.0, %v1049
    %v1051 = vpop.f32.mrb[0].mxu0
    %v1052 = vpop.f32.mrb[0].mxu0
    %v1053 = vpop.f32.mrb[0].mxu0
    %1054 = vdwg.mxu0
    %vm1055 = vcmask 1040384
    %v1056 = vsel %vm1055, %v392, 0.0
    %v1057 = vsel %vm1055, %v486, 0.0
    %v1058 = vadd.f32 %v1056, %v1057
    %v1059 = vsel %vm1055, %v580, 0.0
    %v1060 = vadd.f32 %v1058, %v1059
    %v1061 = vsel %vm1055, %v674, 0.0
    %v1062 = vadd.f32 %v1060, %v1061
    %v1063 = vsel %vm1055, %v768, 0.0
    %v1064 = vadd.f32 %v1062, %v1063
    %v1065 = vsel %vm1055, %v862, 0.0
    %v1066 = vadd.f32 %v1064, %v1065
    %v1067 = vsel %vm1055, %v956, 0.0
    %v1068 = vadd.f32 %v1066, %v1067
    %v1069 = vsel %vm1055, %v1050, 0.0
    %v1070 = vadd.f32 %v1068, %v1069
    %v1071 = vld [vmem:[%s4] sm:$0x1]
    %v1072 = vadd.f32 %v1070, %v1071
    %vm1073 = vcmp.gt.f32.partialorder %v1072, 0.0
    %v1074 = vmul.f32 %v1072, 0.2
    %v1075 = vsel %vm1073, %v1072, %v1074
    %v1076 = vld [vmem:[%s5] sm:$0x1]
    %v1077 = vmul.f32 %v1075, %v1076
    %v1078 = vsel %vm1055, %v1077, 0.0
    %1079 = vadd.xlane.f32.xlu0 %v1078
    %v1080 = vpop.xlane.xlu0 %1079
    %v1081 = vld [vmem:[#allocation2] sm:$0x1]
    %v1082 = vadd.f32 %v1080, %v1081
    %v1083 = vxor.u32 %v1082, 2147483648
    %v1084 = vmul.f32 %v1083, 1.442695
    %v1085 = vpow.pop %v1084
    %v1086 = vadd.f32 %v1085, 1.0
    %v1087 = vrcp.pop %v1086
    %v1088 = vmul.f32 1.0, %v1087
    %vm1089 = vcmask 0
    %1090 = vst.msk [vmem:[#allocation9] sm:$0x1] %vm1089, %v1088
    // Predicated region
    $region42: #{tpu_custom_call.1} parent=1 // pred_check
      _
    $region43: #{tpu_custom_call.1} parent=1 // pred_check_branch
      %1092 = sbr.rel (0) target = $region45
    $region44: #{tpu_custom_call.1} parent=1 // pred_region
      %s1094 = ssub.s32 16, 16
      %1095 = vsyncadd [#allocation5], %s1094
      %s1097 = sshll.u32 [#allocation9], 4
      %s1098 = int_to_ptr.vmem [resolvable:$true] %s1097
      %1100 = dma.vmem_to_hbm [thread:$0]  %s1098, 16, %s7, [#allocation5]
    $region45: #{tpu_custom_call.1} parent=1 // pred_fallthru
      _
    // Predicated region
    $region46: #{tpu_custom_call.1} parent=1 // pred_check
      _
    $region47: #{tpu_custom_call.1} parent=1 // pred_check_branch
      %1102 = sbr.rel (0) target = $region49
    $region48: #{tpu_custom_call.1} parent=1 // pred_region
      %1103 = dma.done [#allocation5], 16
    $region49: #{tpu_custom_call.1} parent=1 // pred_fallthru
      _
    %1104 = vsyncpa [#allocation4], 1
    %1105 = vsyncpa [#allocation7], 1
    %1106 = vsyncpa [#allocation5], 1

</llo_original>
